<compile_context>
chip_gen: v7x
topology: tpu7x:2x2x1
jax: 0.10.0
libtpu: 0.0.40
codegen_flags: <defaults>
</compile_context>

<pallas_src>
import functools

import jax
import jax.numpy as jnp
from jax.experimental import pallas as pl
from jax.experimental.pallas import tpu as pltpu

MARGIN = 2.0
EPS = 1e-6  # matches F.pairwise_distance default eps


def _round_up(x, m):
    return (x + m - 1) // m * m


def _contrastive_loss_kernel(o1_ref, o2_ref, lab_ref, out_ref, acc_ref, *,
                             batch, tile_rows, margin):
    pid = pl.program_id(0)

    @pl.when(pid == 0)
    def _init():
        acc_ref[0, 0] = jnp.float32(0.0)

    # Inputs arrive in their native dtype; cast to f32 in-register.
    o1 = o1_ref[...].astype(jnp.float32)          # (TB, D)
    o2 = o2_ref[...].astype(jnp.float32)          # (TB, D)
    lab = lab_ref[...].astype(jnp.float32)        # (TB, 1)

    # F.pairwise_distance adds eps to the element-wise difference before the norm.
    diff = o1 - o2 + EPS
    sq = jnp.sum(diff * diff, axis=-1, keepdims=True)   # (TB, 1) == d**2
    d = jnp.sqrt(sq)                                     # euclidean_distance

    md = margin - d
    # Use `sq` directly for the similar-pair term (no sqrt->square round trip).
    per_pair = (1.0 - lab) * sq + lab * (md * md)        # (TB, 1)

    # Mask batch-padding rows so they contribute zero to the sum.
    row = jax.lax.broadcasted_iota(jnp.int32, per_pair.shape, 0) + pid * tile_rows
    per_pair = jnp.where(row < batch, per_pair, 0.0)

    acc_ref[0, 0] = acc_ref[0, 0] + jnp.sum(per_pair)

    @pl.when(pid == pl.num_programs(0) - 1)
    def _finalize():
        out_ref[0, 0] = acc_ref[0, 0] / jnp.float32(batch)


def contrastive_loss(output1, output2, label, *, margin=MARGIN, tile_rows=None):
    """output1, output2: (B, D) arrays (any float dtype); label: (B,) or (B, 1)."""
    B, D = output1.shape
    elem_bytes = jnp.dtype(output1.dtype).itemsize

    if tile_rows is None:
        # ~2 MiB per input tile -> 2 inputs x 2 pipeline buffers ≈ 8 MiB of VMEM,
        # comfortably under the default scoped VMEM limit on v5e / v6e / v7x.
        budget_rows = max(8, (2 * 1024 * 1024) // max(1, D * elem_bytes))
        tile_rows = max(8, (budget_rows // 8) * 8)
    tile_rows = min(tile_rows, _round_up(B, 8))

    b_pad = _round_up(B, tile_rows)
    label_flat = label.reshape(B).astype(jnp.float32)   # tiny (B*4 bytes), negligible traffic
    if b_pad != B:
        pad = b_pad - B
        output1 = jnp.pad(output1, ((0, pad), (0, 0)))
        output2 = jnp.pad(output2, ((0, pad), (0, 0)))
        label_flat = jnp.pad(label_flat, ((0, pad),))
    label2d = label_flat.reshape(b_pad, 1)

    grid = (b_pad // tile_rows,)

    kernel = functools.partial(
        _contrastive_loss_kernel,
        batch=B, tile_rows=tile_rows, margin=float(margin))

    cost = pl.CostEstimate(
        flops=4 * B * D,
        transcendentals=B,
        bytes_accessed=2 * B * D * elem_bytes + B * 4 + 4,
    )

    out = pl.pallas_call(
        kernel,
        out_shape=jax.ShapeDtypeStruct((1, 1), jnp.float32),
        grid_spec=pltpu.PrefetchScalarGridSpec(
            num_scalar_prefetch=0,
            grid=grid,
            in_specs=[
                pl.BlockSpec((tile_rows, D), lambda i: (i, 0)),
                pl.BlockSpec((tile_rows, D), lambda i: (i, 0)),
                pl.BlockSpec((tile_rows, 1), lambda i: (i, 0)),
            ],
            out_specs=pl.BlockSpec(memory_space=pltpu.MemorySpace.SMEM),
            scratch_shapes=[pltpu.SMEM((1, 1), jnp.float32)],
        ),
        compiler_params=pltpu.CompilerParams(
            dimension_semantics=("arbitrary",)),
        cost_estimate=cost,
    )(output1, output2, label2d)
    return out[0, 0]


def _reference(output1, output2, label, margin=MARGIN):
    # Pure-JAX reference mirroring the PyTorch module (f32).
    o1 = output1.astype(jnp.float32)
    o2 = output2.astype(jnp.float32)
    d = jnp.sqrt(jnp.sum((o1 - o2 + EPS) ** 2, axis=-1))
    return jnp.mean((1.0 - label) * d**2 + label * (margin - d) ** 2)


if __name__ == "__main__":
    key = jax.random.PRNGKey(0)
    k1, k2, k3 = jax.random.split(key, 3)

    # Small shapes consistent with the module: a batch of embedding pairs.
    B, D = 8, 32
    output1 = jax.random.normal(k1, (B, D), dtype=jnp.float32)
    output2 = jax.random.normal(k2, (B, D), dtype=jnp.float32)
    label = jax.random.bernoulli(k3, 0.5, (B,)).astype(jnp.float32)

    loss = jax.block_until_ready(contrastive_loss(output1, output2, label))
    ref = _reference(output1, output2, label)
    assert jnp.allclose(loss, ref, rtol=1e-5, atol=1e-5), (loss, ref)

    # Exercise the multi-tile + padding/masking path with native-bf16 inputs
    # (no wrapper upcast; grid of 3 tiles, 4 padded rows masked out).
    B2, D2 = 20, 32
    o1b = jax.random.normal(k1, (B2, D2), dtype=jnp.bfloat16)
    o2b = jax.random.normal(k2, (B2, D2), dtype=jnp.bfloat16)
    lab2 = jax.random.bernoulli(k3, 0.5, (B2,)).astype(jnp.float32)
    loss2 = jax.block_until_ready(contrastive_loss(o1b, o2b, lab2, tile_rows=8))
    ref2 = _reference(o1b, o2b, lab2)
    assert jnp.allclose(loss2, ref2, rtol=1e-5, atol=1e-5), (loss2, ref2)

    print("KERNEL_OK")
</pallas_src>

<mosaic_0001>
module attributes {stable_mosaic.version = 11 : i64} {
  func.func @_contrastive_loss_kernel(%arg0: i32, %arg1: memref<8x32xf32, #tpu.memory_space<vmem>>, %arg2: memref<8x32xf32, #tpu.memory_space<vmem>>, %arg3: memref<8x1xf32, #tpu.memory_space<vmem>>, %arg4: memref<1x1xf32, #tpu.memory_space<smem>>, %arg5: memref<1x1xf32, #tpu.memory_space<smem>>) attributes {dimension_semantics = [#tpu.dimension_semantics<arbitrary>], iteration_bounds = array<i64: 1>, scalar_prefetch = 0 : i64, scratch_operands = 1 : i64, tpu.core_type = #tpu.core_type<tc>, window_params = [{transform_indices = @transform_0, window_bounds = array<i64: 8, 32>}, {transform_indices = @transform_1, window_bounds = array<i64: 8, 32>}, {transform_indices = @transform_2, window_bounds = array<i64: 8, 1>}, {transform_indices = @transform_3, window_bounds = array<i64: 1, 1>}]} {
    %c0_i32 = arith.constant 0 : i32
    %0 = arith.cmpi eq, %arg0, %c0_i32 : i32
    %1 = arith.extui %0 : i1 to i32
    %c0_i32_0 = arith.constant 0 : i32
    %2 = arith.cmpi ne, %1, %c0_i32_0 : i32
    scf.if %2 {
      %cst_18 = arith.constant 0.000000e+00 : f32
      %c0_19 = arith.constant 0 : index
      %c0_20 = arith.constant 0 : index
      %39 = memref.load %arg5[%c0_19, %c0_20] : memref<1x1xf32, #tpu.memory_space<smem>>
      memref.store %cst_18, %arg5[%c0_19, %c0_20] : memref<1x1xf32, #tpu.memory_space<smem>>
    } else {
    }
    %c0 = arith.constant 0 : index
    %c0_1 = arith.constant 0 : index
    %3 = vector.load %arg1[%c0, %c0_1] : memref<8x32xf32, #tpu.memory_space<vmem>>, vector<8x32xf32>
    %c0_2 = arith.constant 0 : index
    %c0_3 = arith.constant 0 : index
    %4 = vector.load %arg2[%c0_2, %c0_3] : memref<8x32xf32, #tpu.memory_space<vmem>>, vector<8x32xf32>
    %c0_4 = arith.constant 0 : index
    %c0_5 = arith.constant 0 : index
    %5 = vector.load %arg3[%c0_4, %c0_5] : memref<8x1xf32, #tpu.memory_space<vmem>>, vector<8x1xf32>
    %6 = arith.subf %3, %4 : vector<8x32xf32>
    %cst = arith.constant 9.99999997E-7 : f32
    %7 = vector.broadcast %cst : f32 to vector<8x32xf32>
    %8 = arith.addf %6, %7 : vector<8x32xf32>
    %9 = arith.mulf %8, %8 : vector<8x32xf32>
    %cst_6 = arith.constant dense<0.000000e+00> : vector<8xf32>
    %10 = vector.multi_reduction <add>, %9, %cst_6 [1] : vector<8x32xf32> to vector<8xf32>
    %11 = vector.shape_cast %10 : vector<8xf32> to vector<8x1xf32>
    %12 = math.sqrt %11 : vector<8x1xf32>
    %cst_7 = arith.constant 2.000000e+00 : f32
    %13 = vector.broadcast %cst_7 : f32 to vector<8x1xf32>
    %14 = arith.subf %13, %12 : vector<8x1xf32>
    %cst_8 = arith.constant 1.000000e+00 : f32
    %15 = vector.broadcast %cst_8 : f32 to vector<8x1xf32>
    %16 = arith.subf %15, %5 : vector<8x1xf32>
    %17 = arith.mulf %16, %11 : vector<8x1xf32>
    %18 = arith.mulf %14, %14 : vector<8x1xf32>
    %19 = arith.mulf %5, %18 : vector<8x1xf32>
    %20 = arith.addf %17, %19 : vector<8x1xf32>
    %21 = tpu.iota {dimensions = array<i32: 0>} : vector<8x1xi32>
    %c8_i32 = arith.constant 8 : i32
    %22 = arith.muli %arg0, %c8_i32 : i32
    %23 = vector.broadcast %22 : i32 to vector<8x1xi32>
    %24 = arith.addi %21, %23 : vector<8x1xi32>
    %c8_i32_9 = arith.constant 8 : i32
    %25 = vector.broadcast %c8_i32_9 : i32 to vector<8x1xi32>
    %26 = arith.cmpi slt, %24, %25 : vector<8x1xi32>
    %cst_10 = arith.constant 0.000000e+00 : f32
    %27 = vector.broadcast %cst_10 : f32 to vector<8x1xf32>
    %28 = arith.select %26, %20, %27 : vector<8x1xi1>, vector<8x1xf32>
    %c0_11 = arith.constant 0 : index
    %c0_12 = arith.constant 0 : index
    %29 = memref.load %arg5[%c0_11, %c0_12] : memref<1x1xf32, #tpu.memory_space<smem>>
    %30 = vector.shape_cast %28 : vector<8x1xf32> to vector<1x8x1xf32>
    %cst_13 = arith.constant dense<0.000000e+00> : vector<1xf32>
    %31 = vector.multi_reduction <add>, %30, %cst_13 [1, 2] : vector<1x8x1xf32> to vector<1xf32>
    %32 = vector.shape_cast %31 : vector<1xf32> to vector<1x1x1xf32>
    %33 = vector.extract %32[0, 0, 0] : f32 from vector<1x1x1xf32>
    %34 = arith.addf %29, %33 : f32
    %c0_14 = arith.constant 0 : index
    %c0_15 = arith.constant 0 : index
    %35 = memref.load %arg5[%c0_14, %c0_15] : memref<1x1xf32, #tpu.memory_space<smem>>
    memref.store %34, %arg5[%c0_14, %c0_15] : memref<1x1xf32, #tpu.memory_space<smem>>
    %c0_i32_16 = arith.constant 0 : i32
    %36 = arith.cmpi eq, %arg0, %c0_i32_16 : i32
    %37 = arith.extui %36 : i1 to i32
    %c0_i32_17 = arith.constant 0 : i32
    %38 = arith.cmpi ne, %37, %c0_i32_17 : i32
    scf.if %38 {
      %c0_18 = arith.constant 0 : index
      %c0_19 = arith.constant 0 : index
      %39 = memref.load %arg5[%c0_18, %c0_19] : memref<1x1xf32, #tpu.memory_space<smem>>
      %cst_20 = arith.constant 8.000000e+00 : f32
      %40 = arith.divf %39, %cst_20 : f32
      %c0_21 = arith.constant 0 : index
      %c0_22 = arith.constant 0 : index
      %41 = memref.load %arg4[%c0_21, %c0_22] : memref<1x1xf32, #tpu.memory_space<smem>>
      memref.store %40, %arg4[%c0_21, %c0_22] : memref<1x1xf32, #tpu.memory_space<smem>>
    } else {
    }
    return
  }
  func.func @transform_0(%arg0: i32) -> (i32, i32) {
    %c0_i32 = arith.constant 0 : i32
    %c0_i32_0 = arith.constant 0 : i32
    return %arg0, %c0_i32 : i32, i32
  }
  func.func @transform_1(%arg0: i32) -> (i32, i32) {
    %c0_i32 = arith.constant 0 : i32
    %c0_i32_0 = arith.constant 0 : i32
    return %arg0, %c0_i32 : i32, i32
  }
  func.func @transform_2(%arg0: i32) -> (i32, i32) {
    %c0_i32 = arith.constant 0 : i32
    %c0_i32_0 = arith.constant 0 : i32
    return %arg0, %c0_i32 : i32, i32
  }
  func.func @transform_3(%arg0: i32) -> (i32, i32) {
    %c0_i32 = arith.constant 0 : i32
    %c0_i32_0 = arith.constant 0 : i32
    %c0_i32_1 = arith.constant 0 : i32
    return %c0_i32, %c0_i32_0 : i32, i32
  }
}

</mosaic_0001>

<llo_original>
// kernel: tpu_custom_call.1
$region0: #{tpu_custom_call.1}
  #allocation0 [shape = 'u32[]', space=smem, size = 0x4, offset = 0x4, fixed_abs, tag = 'smem constant byte address 0x4 - core index']
  #allocation1 [shape = 'u32[144,128]{1,0:T(1,128)}', space=vmem, size = 0x12000, scoped, tag = 'internal scratch']
  #allocation2 [shape = 'f32[1,1]{1,0:T(1,128)}', space=smem, size = 0x200, scoped, tag = 'scratch operand']
  %s0 = inlined_call_operand.vmem [shape: f32[8,32], index: 0, kind: input, shape index: {}]
  %s1 = inlined_call_operand.hbm [shape: f32[8,32], index: 1, kind: input, shape index: {}]
  %s2 = inlined_call_operand.vmem [shape: f32[8,1], index: 2, kind: input, shape index: {}]
  %s3 = inlined_call_operand.hbm [shape: f32[1,1], index: 3, kind: output, shape index: {}]
  %s4 = sld [smem:[#allocation0]]
  $region34: #{tpu_custom_call.1} parent=0
    _
  %s6 = ssub.s32 1, %s4
  %s7 = scalar_select 0, %s6, %s4
  $region1: #{tpu_custom_call.1} parent=0
    #allocation3 [shape = 'u8[4096]{0}', space=vmem, size = 0x1000, scoped, tag = 'input window, operand 1, single buffered']
    #allocation4 [shape = 's32[1]{0}', space=sflag, size = 0x4, scoped, tag = 'scoped memory for tpu_custom_call.1']
    #allocation5 [shape = 's32[1]{0}', space=sflag, size = 0x4, scoped, tag = 'scoped memory for tpu_custom_call.1']
    #allocation6 [shape = 'u8[512]{0}', space=smem, size = 0x200, scoped, tag = 'output window, operand 0, single buffered']
    %8 = vsyncpa [#allocation4], 0
    %9 = vsyncpa [#allocation5], 0
    // Predicated region
    $region2: #{tpu_custom_call.1} parent=1 // pred_check
      _
    $region3: #{tpu_custom_call.1} parent=1 // pred_check_branch
      %11 = sbr.rel (0) target = $region5
    $region4: #{tpu_custom_call.1} parent=1 // pred_region
      _
    $region5: #{tpu_custom_call.1} parent=1 // pred_fallthru
      _
    // Predicated region
    $region6: #{tpu_custom_call.1} parent=1 // pred_check
      _
    $region7: #{tpu_custom_call.1} parent=1 // pred_check_branch
      %13 = sbr.rel (0) target = $region9
    $region8: #{tpu_custom_call.1} parent=1 // pred_region
      %s15 = ssub.s32 128, 128
      %16 = vsyncadd [#allocation4], %s15
      %s18 = sshll.u32 [#allocation3], 4
      %s19 = int_to_ptr.vmem [resolvable:$true] %s18
      %21 = dma.hbm_to_vmem [thread:$0]  %s1, 128, %s19, [#allocation4]
    $region9: #{tpu_custom_call.1} parent=1 // pred_fallthru
      _
    // Predicated region
    $region10: #{tpu_custom_call.1} parent=1 // pred_check
      _
    $region11: #{tpu_custom_call.1} parent=1 // pred_check_branch
      %23 = sbr.rel (0) target = $region13
    $region12: #{tpu_custom_call.1} parent=1 // pred_region
      _
    $region13: #{tpu_custom_call.1} parent=1 // pred_fallthru
      _
    // Predicated region
    $region14: #{tpu_custom_call.1} parent=1 // pred_check
      _
    $region15: #{tpu_custom_call.1} parent=1 // pred_check_branch
      %25 = sbr.rel (0) target = $region17
    $region16: #{tpu_custom_call.1} parent=1 // pred_region
      %26 = dma.done [#allocation4], 128
    $region17: #{tpu_custom_call.1} parent=1 // pred_fallthru
      _
    %p27 = scmp.eq.s32.totalorder 0, 0
    // Predicated region
    $region18: #{tpu_custom_call.1} parent=1 // pred_check
      %p28 = pneg %p27
    $region19: #{tpu_custom_call.1} parent=1 // pred_check_branch
      %30 = sbr.rel (%p28) target = $region21
    $region20: #{tpu_custom_call.1} parent=1 // pred_region
      %s31 = scalar_lea.smem [#allocation2], 0
      %32 = sst [smem:[%s31]] 0.0
    $region21: #{tpu_custom_call.1} parent=1 // pred_fallthru
      _
    %v33 = vld [vmem:[%s0] sm:$0xff]
    %v34 = vld [vmem:[#allocation3] sm:$0xff]
    %v35 = vld [vmem:[%s2] sm:$0xff]
    %v36 = vsub.f32 %v33, %v34
    %v37 = vadd.f32 %v36, 1e-06
    %v38 = vmul.f32 %v37, %v37
    %vm39 = vcmask 261120
    %v40 = vsel %vm39, %v38, 0.0
    %41 = vadd.xlane.f32.xlu0 %v40
    %v42 = vpop.xlane.xlu0 %41
    %v43 = vrsqrt.pop %v42
    %v44 = vmul.f32 %v42, %v43
    %vm45 = vcmp.eq.f32.partialorder %v42, inf
    %v46 = vsel %vm45, %v42, %v44
    %vm47 = vcmp.eq.f32.partialorder %v42, 0.0
    %v48 = vand.u32 %v42, 2147483648
    %v49 = vsel %vm47, %v48, %v46
    %v50 = vsub.f32 2.0, %v49
    %v51 = vsub.f32 1.0, %v35
    %v52 = vmul.f32 %v51, %v42
    %v53 = vmul.f32 %v50, %v50
    %v54 = vmul.f32 %v35, %v53
    %v55 = vadd.f32 %v52, %v54
    %v56 = vlaneseq
    %v57 = vshrl.u32 %v56, 7
    %s58 = smul.u32 0, 8
    %v59 = vstv %s58
    %v60 = vadd.s32 %v57, %v59
    %vm61 = vcmp.lt.s32.totalorder %v60, 8
    %v62 = vsel %vm61, %v55, 0.0
    %s63 = sld [smem:[#allocation2]]
    %vm64 = vcmask 7168
    %v65 = vsel %vm64, %v62, 0.0
    %66 = vadd.xlane.f32.xlu0 %v65
    %v67 = vpop.xlane.xlu0 %66
    %v68 = vrot.slane %v67, 4
    %v69 = vadd.f32 %v67, %v68
    %v70 = vrot.slane %v69, 2
    %v71 = vadd.f32 %v69, %v70
    %v72 = vrot.slane %v71, 1
    %v73 = vadd.f32 %v71, %v72
    %s74 = vtos %v73
    %s75 = sadd.f32 %s63, %s74
    %s76 = scalar_lea.smem [#allocation2], 0
    %77 = sst [smem:[%s76]] %s75
    // Predicated region
    $region22: #{tpu_custom_call.1} parent=1 // pred_check
      %p78 = pneg %p27
    $region23: #{tpu_custom_call.1} parent=1 // pred_check_branch
      %80 = sbr.rel (%p78) target = $region25
    $region24: #{tpu_custom_call.1} parent=1 // pred_region
      %s81 = sld [smem:[#allocation2]]
      %v82 = vrcp.pop 8.0
      %s83 = vtos %v82
      %s84 = smul.f32 %s81, %s83
      %s85 = scalar_lea.smem [#allocation6], 0
      %86 = sst [smem:[%s85]] %s84
    $region25: #{tpu_custom_call.1} parent=1 // pred_fallthru
      _
    // Predicated region
    $region26: #{tpu_custom_call.1} parent=1 // pred_check
      _
    $region27: #{tpu_custom_call.1} parent=1 // pred_check_branch
      %88 = sbr.rel (0) target = $region29
    $region28: #{tpu_custom_call.1} parent=1 // pred_region
      %s90 = ssub.s32 16, 16
      %91 = vsyncadd [#allocation5], %s90
      %94 = dma.smem_to_hbm [#allocation6], 16, %s3, [#allocation5]
    $region29: #{tpu_custom_call.1} parent=1 // pred_fallthru
      _
    // Predicated region
    $region30: #{tpu_custom_call.1} parent=1 // pred_check
      _
    $region31: #{tpu_custom_call.1} parent=1 // pred_check_branch
      %96 = sbr.rel (0) target = $region33
    $region32: #{tpu_custom_call.1} parent=1 // pred_region
      %97 = dma.done [#allocation5], 16
    $region33: #{tpu_custom_call.1} parent=1 // pred_fallthru
      _
    %98 = sfence
    %99 = vsyncpa [#allocation4], 1
    %100 = vsyncpa [#allocation5], 1

</llo_original>
